<compile_context>
chip_gen: v7x
topology: tpu7x:2x2x1
jax: 0.10.0
libtpu: 0.0.40
codegen_flags: <defaults>
</compile_context>

<pallas_src>
import functools

import jax
import jax.numpy as jnp
from jax.experimental import pallas as pl
from jax.experimental.pallas import tpu as pltpu

_LANE = 128
_SUBLANE = 8


def _round_up(x: int, m: int) -> int:
    return ((x + m - 1) // m) * m


def _make_fused_lifnet_kernel(T: int, tau: float, v_th: float,
                              Bt: int, h_pad: int, dout_pad: int):
    """Fused fc_1 + fc_2 LIF forward for one batch tile; all T steps in one body."""
    inv_tau = 1.0 / float(tau)
    decay = 1.0 - inv_tau
    inv_T = 1.0 / float(T)

    def kernel(x_ref, w1_ref, w2_ref, mean_ref):
        # ---- fc_1: the input frame is repeated over T, so its current is
        # time-constant -> ONE bf16 MXU matmul, f32 accumulate. ---------------
        i1 = jnp.dot(x_ref[...], w1_ref[...],
                     preferred_element_type=jnp.float32)          # (Bt, h_pad) f32
        i1_scaled = i1 * inv_tau                                  # hoisted I1/tau
        w2 = w2_ref[...]                                          # (h_pad, dout_pad) bf16

        v1 = jnp.zeros((Bt, h_pad), jnp.float32)
        v2 = jnp.zeros((Bt, dout_pad), jnp.float32)
        acc = jnp.zeros((Bt, dout_pad), jnp.float32)

        for _ in range(T):                                        # static unroll over T
            # layer-1 LIF:  v <- v*(1-1/tau) + I/tau ; spike ; hard reset to 0
            v1 = v1 * decay + i1_scaled
            fire1 = v1 >= v_th
            s1 = fire1.astype(jnp.bfloat16)                       # spikes exact in bf16
            v1 = jnp.where(fire1, 0.0, v1)

            # layer-2 current: fused per-step bf16 matmul (no spike train kept)
            i2 = jnp.dot(s1, w2, preferred_element_type=jnp.float32)

            # layer-2 LIF + running time-sum (scaled once at the end)
            v2 = v2 * decay + i2 * inv_tau
            fire2 = v2 >= v_th
            acc = acc + fire2.astype(jnp.float32)
            v2 = jnp.where(fire2, 0.0, v2)

        mean_ref[...] = acc * inv_T                               # lane-dense f32 store

    return kernel


@functools.partial(jax.jit, static_argnames=("T", "tau", "v_th"))
def sddtpc_lifnet_forward(img, labels, w1, w2, *, T: int, tau: float, v_th: float):
    """Eval-mode forward of SDDTPC_LIFNet.

    img:    (B, C, H, W) float32  (NCHW, as in PyTorch)
    labels: (B, output_size) float32 (targets for F.mse_loss)
    w1:     (C*H*W, hidden) float32   (transposed vs. nn.Linear)
    w2:     (hidden, output_size) float32
    Returns (spikes_2.mean(time) of shape (B, output_size), scalar mse loss).
    """
    B = img.shape[0]
    x = img.reshape(B, -1).astype(jnp.float32)                    # (B, Din)
    din = x.shape[1]
    hidden = w1.shape[1]
    dout = w2.shape[1]

    # Lane-dense padding of every contraction / output dimension (zero columns
    # contribute zero current and never spike, so semantics are unchanged).
    din_pad = max(_LANE, _round_up(din, _LANE))
    h_pad = max(_LANE, _round_up(hidden, _LANE))
    dout_pad = max(_LANE, _round_up(dout, _LANE))

    # Pad batch to the f32 sublane width; tile it if large so the grid can
    # pipeline the x stream and shard across TensorCores (v7x megacore).
    B_pad = _round_up(B, _SUBLANE)
    if B_pad > _LANE:
        Bt = _LANE
        B_pad = _round_up(B_pad, Bt)
    else:
        Bt = B_pad
    num_bt = B_pad // Bt

    # bf16 MXU operands (f32 accumulation happens inside the kernel).
    x_p = jnp.zeros((B_pad, din_pad), jnp.bfloat16).at[:B, :din].set(
        x.astype(jnp.bfloat16))
    w1_p = jnp.zeros((din_pad, h_pad), jnp.bfloat16).at[:din, :hidden].set(
        w1.astype(jnp.bfloat16))
    w2_p = jnp.zeros((h_pad, dout_pad), jnp.bfloat16).at[:hidden, :dout].set(
        w2.astype(jnp.bfloat16))

    # Explicit scoped-VMEM budget: generous vs. the tiny working set, at least
    # the v5e default (16 MiB), capped well under v7x's 64 MiB physical VMEM.
    block_bytes = (2 * Bt * din_pad * 2        # x tile, double-buffered, bf16
                   + 2 * din_pad * h_pad * 2   # W1 (resident, default 2 bufs)
                   + 2 * h_pad * dout_pad * 2  # W2
                   + 2 * Bt * dout_pad * 4)    # output tile, f32
    live_bytes = Bt * (3 * h_pad + 4 * dout_pad) * 4
    vmem_limit = int(min(60 << 20, max(16 << 20, 2 * (block_bytes + live_bytes))))

    kernel = _make_fused_lifnet_kernel(T, tau, v_th, Bt, h_pad, dout_pad)

    mean_pad = pl.pallas_call(
        kernel,
        out_shape=jax.ShapeDtypeStruct((B_pad, dout_pad), jnp.float32),
        grid=(num_bt,),
        in_specs=[
            pl.BlockSpec((Bt, din_pad), lambda i: (i, 0)),        # x batch tile
            pl.BlockSpec((din_pad, h_pad), lambda i: (0, 0)),     # W1, resident
            pl.BlockSpec((h_pad, dout_pad), lambda i: (0, 0)),    # W2, resident
        ],
        out_specs=pl.BlockSpec((Bt, dout_pad), lambda i: (i, 0)),
        compiler_params=pltpu.CompilerParams(
            dimension_semantics=("parallel",),                    # batch rows independent
            vmem_limit_bytes=vmem_limit,
        ),
    )(x_p, w1_p, w2_p)

    out_mean = mean_pad[:B, :dout]
    # F.mse_loss(x.mean(1), labels), default reduction='mean' (tiny JAX glue;
    # the mean itself must be returned, so no extra HBM traffic is added).
    loss = jnp.mean((out_mean - labels) ** 2)
    return out_mean, loss


if __name__ == "__main__":
    # Small shapes consistent with the module (FMNIST-style, shrunk).
    B, C, H, W = 2, 1, 16, 16
    T = 4
    input_size = C * H * W          # 256
    hidden_size = 128
    output_size = 10
    tau = 2.0
    v_threshold = 2.0               # passed to both ConnectedFCBlocks in __init__

    key = jax.random.PRNGKey(0)
    k_img, k_lab, k_w1, k_w2 = jax.random.split(key, 4)

    img = jax.random.uniform(k_img, (B, C, H, W), dtype=jnp.float32)
    label_idx = jax.random.randint(k_lab, (B,), 0, output_size)
    labels = jax.nn.one_hot(label_idx, output_size, dtype=jnp.float32)

    # nn.Linear-style init (uniform +/- 1/sqrt(fan_in)), bias=False as in the module.
    w1 = jax.random.uniform(
        k_w1, (input_size, hidden_size), dtype=jnp.float32,
        minval=-1.0 / (input_size ** 0.5), maxval=1.0 / (input_size ** 0.5))
    w2 = jax.random.uniform(
        k_w2, (hidden_size, output_size), dtype=jnp.float32,
        minval=-1.0 / (hidden_size ** 0.5), maxval=1.0 / (hidden_size ** 0.5))

    out_mean, loss = sddtpc_lifnet_forward(
        img, labels, w1, w2, T=T, tau=tau, v_th=v_threshold)
    jax.block_until_ready((out_mean, loss))

    assert out_mean.shape == (B, output_size)
    assert loss.shape == ()
    # Spike-rate means must lie in [0, 1] and be finite.
    assert bool(jnp.all((out_mean >= 0.0) & (out_mean <= 1.0)))
    assert bool(jnp.isfinite(loss))
    print("KERNEL_OK")
</pallas_src>

<mosaic_0001>
module attributes {stable_mosaic.version = 11 : i64} {
  func.func @kernel(%arg0: i32, %arg1: memref<8x256xbf16, #tpu.memory_space<vmem>>, %arg2: memref<256x128xbf16, #tpu.memory_space<vmem>>, %arg3: memref<128x128xbf16, #tpu.memory_space<vmem>>, %arg4: memref<8x128xf32, #tpu.memory_space<vmem>>) attributes {dimension_semantics = [#tpu.dimension_semantics<parallel>], iteration_bounds = array<i64: 1>, scalar_prefetch = 0 : i64, scratch_operands = 0 : i64, tpu.core_type = #tpu.core_type<tc>, window_params = [{transform_indices = @transform_0, window_bounds = array<i64: 8, 256>}, {pipeline_mode = #tpu.pipeline_mode<synchronous>, transform_indices = @transform_1, window_bounds = array<i64: 256, 128>}, {pipeline_mode = #tpu.pipeline_mode<synchronous>, transform_indices = @transform_2, window_bounds = array<i64: 128, 128>}, {transform_indices = @transform_3, window_bounds = array<i64: 8, 128>}]} {
    %c0 = arith.constant 0 : index
    %c0_0 = arith.constant 0 : index
    %0 = vector.load %arg1[%c0, %c0_0] : memref<8x256xbf16, #tpu.memory_space<vmem>>, vector<8x256xbf16>
    %c0_1 = arith.constant 0 : index
    %c0_2 = arith.constant 0 : index
    %1 = vector.load %arg2[%c0_1, %c0_2] : memref<256x128xbf16, #tpu.memory_space<vmem>>, vector<256x128xbf16>
    %cst = arith.constant dense<0.000000e+00> : vector<8x128xf32>
    %2 = tpu.matmul %0, %1, %cst {dimension_numbers = #tpu.dot_dimension_numbers<[1], [0], [0], [1], [0, 0, 1, 1], [], []>} : vector<8x256xbf16>, vector<256x128xbf16>, vector<8x128xf32> -> vector<8x128xf32>
    %cst_3 = arith.constant 5.000000e-01 : f32
    %3 = vector.broadcast %cst_3 : f32 to vector<8x128xf32>
    %4 = arith.mulf %2, %3 : vector<8x128xf32>
    %c0_4 = arith.constant 0 : index
    %c0_5 = arith.constant 0 : index
    %5 = vector.load %arg3[%c0_4, %c0_5] : memref<128x128xbf16, #tpu.memory_space<vmem>>, vector<128x128xbf16>
    %cst_6 = arith.constant 0.000000e+00 : f32
    %6 = vector.broadcast %cst_6 : f32 to vector<8x128xf32>
    %cst_7 = arith.constant 0.000000e+00 : f32
    %7 = vector.broadcast %cst_7 : f32 to vector<8x128xf32>
    %cst_8 = arith.constant 0.000000e+00 : f32
    %8 = vector.broadcast %cst_8 : f32 to vector<8x128xf32>
    %cst_9 = arith.constant 5.000000e-01 : f32
    %9 = vector.broadcast %cst_9 : f32 to vector<8x128xf32>
    %10 = arith.mulf %6, %9 : vector<8x128xf32>
    %11 = arith.addf %10, %4 : vector<8x128xf32>
    %cst_10 = arith.constant 2.000000e+00 : f32
    %12 = vector.broadcast %cst_10 : f32 to vector<8x128xf32>
    %13 = arith.cmpf oge, %11, %12 : vector<8x128xf32>
    %14 = arith.extui %13 : vector<8x128xi1> to vector<8x128xi32>
    %15 = arith.sitofp %14 : vector<8x128xi32> to vector<8x128xf32>
    %16 = arith.truncf %15 : vector<8x128xf32> to vector<8x128xbf16>
    %cst_11 = arith.constant 0.000000e+00 : f32
    %17 = vector.broadcast %cst_11 : f32 to vector<8x128xf32>
    %18 = arith.select %13, %17, %11 : vector<8x128xi1>, vector<8x128xf32>
    %cst_12 = arith.constant dense<0.000000e+00> : vector<8x128xf32>
    %19 = tpu.matmul %16, %5, %cst_12 {dimension_numbers = #tpu.dot_dimension_numbers<[1], [0], [0], [1], [0, 0, 1, 1], [], []>} : vector<8x128xbf16>, vector<128x128xbf16>, vector<8x128xf32> -> vector<8x128xf32>
    %cst_13 = arith.constant 5.000000e-01 : f32
    %20 = vector.broadcast %cst_13 : f32 to vector<8x128xf32>
    %21 = arith.mulf %7, %20 : vector<8x128xf32>
    %cst_14 = arith.constant 5.000000e-01 : f32
    %22 = vector.broadcast %cst_14 : f32 to vector<8x128xf32>
    %23 = arith.mulf %19, %22 : vector<8x128xf32>
    %24 = arith.addf %21, %23 : vector<8x128xf32>
    %cst_15 = arith.constant 2.000000e+00 : f32
    %25 = vector.broadcast %cst_15 : f32 to vector<8x128xf32>
    %26 = arith.cmpf oge, %24, %25 : vector<8x128xf32>
    %27 = arith.extui %26 : vector<8x128xi1> to vector<8x128xi32>
    %28 = arith.sitofp %27 : vector<8x128xi32> to vector<8x128xf32>
    %29 = arith.addf %8, %28 : vector<8x128xf32>
    %cst_16 = arith.constant 0.000000e+00 : f32
    %30 = vector.broadcast %cst_16 : f32 to vector<8x128xf32>
    %31 = arith.select %26, %30, %24 : vector<8x128xi1>, vector<8x128xf32>
    %cst_17 = arith.constant 5.000000e-01 : f32
    %32 = vector.broadcast %cst_17 : f32 to vector<8x128xf32>
    %33 = arith.mulf %18, %32 : vector<8x128xf32>
    %34 = arith.addf %33, %4 : vector<8x128xf32>
    %cst_18 = arith.constant 2.000000e+00 : f32
    %35 = vector.broadcast %cst_18 : f32 to vector<8x128xf32>
    %36 = arith.cmpf oge, %34, %35 : vector<8x128xf32>
    %37 = arith.extui %36 : vector<8x128xi1> to vector<8x128xi32>
    %38 = arith.sitofp %37 : vector<8x128xi32> to vector<8x128xf32>
    %39 = arith.truncf %38 : vector<8x128xf32> to vector<8x128xbf16>
    %cst_19 = arith.constant 0.000000e+00 : f32
    %40 = vector.broadcast %cst_19 : f32 to vector<8x128xf32>
    %41 = arith.select %36, %40, %34 : vector<8x128xi1>, vector<8x128xf32>
    %cst_20 = arith.constant dense<0.000000e+00> : vector<8x128xf32>
    %42 = tpu.matmul %39, %5, %cst_20 {dimension_numbers = #tpu.dot_dimension_numbers<[1], [0], [0], [1], [0, 0, 1, 1], [], []>} : vector<8x128xbf16>, vector<128x128xbf16>, vector<8x128xf32> -> vector<8x128xf32>
    %cst_21 = arith.constant 5.000000e-01 : f32
    %43 = vector.broadcast %cst_21 : f32 to vector<8x128xf32>
    %44 = arith.mulf %31, %43 : vector<8x128xf32>
    %cst_22 = arith.constant 5.000000e-01 : f32
    %45 = vector.broadcast %cst_22 : f32 to vector<8x128xf32>
    %46 = arith.mulf %42, %45 : vector<8x128xf32>
    %47 = arith.addf %44, %46 : vector<8x128xf32>
    %cst_23 = arith.constant 2.000000e+00 : f32
    %48 = vector.broadcast %cst_23 : f32 to vector<8x128xf32>
    %49 = arith.cmpf oge, %47, %48 : vector<8x128xf32>
    %50 = arith.extui %49 : vector<8x128xi1> to vector<8x128xi32>
    %51 = arith.sitofp %50 : vector<8x128xi32> to vector<8x128xf32>
    %52 = arith.addf %29, %51 : vector<8x128xf32>
    %cst_24 = arith.constant 0.000000e+00 : f32
    %53 = vector.broadcast %cst_24 : f32 to vector<8x128xf32>
    %54 = arith.select %49, %53, %47 : vector<8x128xi1>, vector<8x128xf32>
    %cst_25 = arith.constant 5.000000e-01 : f32
    %55 = vector.broadcast %cst_25 : f32 to vector<8x128xf32>
    %56 = arith.mulf %41, %55 : vector<8x128xf32>
    %57 = arith.addf %56, %4 : vector<8x128xf32>
    %cst_26 = arith.constant 2.000000e+00 : f32
    %58 = vector.broadcast %cst_26 : f32 to vector<8x128xf32>
    %59 = arith.cmpf oge, %57, %58 : vector<8x128xf32>
    %60 = arith.extui %59 : vector<8x128xi1> to vector<8x128xi32>
    %61 = arith.sitofp %60 : vector<8x128xi32> to vector<8x128xf32>
    %62 = arith.truncf %61 : vector<8x128xf32> to vector<8x128xbf16>
    %cst_27 = arith.constant 0.000000e+00 : f32
    %63 = vector.broadcast %cst_27 : f32 to vector<8x128xf32>
    %64 = arith.select %59, %63, %57 : vector<8x128xi1>, vector<8x128xf32>
    %cst_28 = arith.constant dense<0.000000e+00> : vector<8x128xf32>
    %65 = tpu.matmul %62, %5, %cst_28 {dimension_numbers = #tpu.dot_dimension_numbers<[1], [0], [0], [1], [0, 0, 1, 1], [], []>} : vector<8x128xbf16>, vector<128x128xbf16>, vector<8x128xf32> -> vector<8x128xf32>
    %cst_29 = arith.constant 5.000000e-01 : f32
    %66 = vector.broadcast %cst_29 : f32 to vector<8x128xf32>
    %67 = arith.mulf %54, %66 : vector<8x128xf32>
    %cst_30 = arith.constant 5.000000e-01 : f32
    %68 = vector.broadcast %cst_30 : f32 to vector<8x128xf32>
    %69 = arith.mulf %65, %68 : vector<8x128xf32>
    %70 = arith.addf %67, %69 : vector<8x128xf32>
    %cst_31 = arith.constant 2.000000e+00 : f32
    %71 = vector.broadcast %cst_31 : f32 to vector<8x128xf32>
    %72 = arith.cmpf oge, %70, %71 : vector<8x128xf32>
    %73 = arith.extui %72 : vector<8x128xi1> to vector<8x128xi32>
    %74 = arith.sitofp %73 : vector<8x128xi32> to vector<8x128xf32>
    %75 = arith.addf %52, %74 : vector<8x128xf32>
    %cst_32 = arith.constant 0.000000e+00 : f32
    %76 = vector.broadcast %cst_32 : f32 to vector<8x128xf32>
    %77 = arith.select %72, %76, %70 : vector<8x128xi1>, vector<8x128xf32>
    %cst_33 = arith.constant 5.000000e-01 : f32
    %78 = vector.broadcast %cst_33 : f32 to vector<8x128xf32>
    %79 = arith.mulf %64, %78 : vector<8x128xf32>
    %80 = arith.addf %79, %4 : vector<8x128xf32>
    %cst_34 = arith.constant 2.000000e+00 : f32
    %81 = vector.broadcast %cst_34 : f32 to vector<8x128xf32>
    %82 = arith.cmpf oge, %80, %81 : vector<8x128xf32>
    %83 = arith.extui %82 : vector<8x128xi1> to vector<8x128xi32>
    %84 = arith.sitofp %83 : vector<8x128xi32> to vector<8x128xf32>
    %85 = arith.truncf %84 : vector<8x128xf32> to vector<8x128xbf16>
    %cst_35 = arith.constant dense<0.000000e+00> : vector<8x128xf32>
    %86 = tpu.matmul %85, %5, %cst_35 {dimension_numbers = #tpu.dot_dimension_numbers<[1], [0], [0], [1], [0, 0, 1, 1], [], []>} : vector<8x128xbf16>, vector<128x128xbf16>, vector<8x128xf32> -> vector<8x128xf32>
    %cst_36 = arith.constant 5.000000e-01 : f32
    %87 = vector.broadcast %cst_36 : f32 to vector<8x128xf32>
    %88 = arith.mulf %77, %87 : vector<8x128xf32>
    %cst_37 = arith.constant 5.000000e-01 : f32
    %89 = vector.broadcast %cst_37 : f32 to vector<8x128xf32>
    %90 = arith.mulf %86, %89 : vector<8x128xf32>
    %91 = arith.addf %88, %90 : vector<8x128xf32>
    %cst_38 = arith.constant 2.000000e+00 : f32
    %92 = vector.broadcast %cst_38 : f32 to vector<8x128xf32>
    %93 = arith.cmpf oge, %91, %92 : vector<8x128xf32>
    %94 = arith.extui %93 : vector<8x128xi1> to vector<8x128xi32>
    %95 = arith.sitofp %94 : vector<8x128xi32> to vector<8x128xf32>
    %96 = arith.addf %75, %95 : vector<8x128xf32>
    %cst_39 = arith.constant 2.500000e-01 : f32
    %97 = vector.broadcast %cst_39 : f32 to vector<8x128xf32>
    %98 = arith.mulf %96, %97 : vector<8x128xf32>
    %c0_40 = arith.constant 0 : index
    %c0_41 = arith.constant 0 : index
    %99 = vector.load %arg4[%c0_40, %c0_41] : memref<8x128xf32, #tpu.memory_space<vmem>>, vector<8x128xf32>
    tpu.vector_store %arg4[%c0_40, %c0_41], %98 {strides = array<i32>} : memref<8x128xf32, #tpu.memory_space<vmem>>, vector<8x128xf32>,
    return
  }
  func.func @transform_0(%arg0: i32) -> (i32, i32) {
    %c0_i32 = arith.constant 0 : i32
    %c0_i32_0 = arith.constant 0 : i32
    return %arg0, %c0_i32 : i32, i32
  }
  func.func @transform_1(%arg0: i32) -> (i32, i32) {
    %c0_i32 = arith.constant 0 : i32
    %c0_i32_0 = arith.constant 0 : i32
    %c0_i32_1 = arith.constant 0 : i32
    return %c0_i32, %c0_i32_0 : i32, i32
  }
  func.func @transform_2(%arg0: i32) -> (i32, i32) {
    %c0_i32 = arith.constant 0 : i32
    %c0_i32_0 = arith.constant 0 : i32
    %c0_i32_1 = arith.constant 0 : i32
    return %c0_i32, %c0_i32_0 : i32, i32
  }
  func.func @transform_3(%arg0: i32) -> (i32, i32) {
    %c0_i32 = arith.constant 0 : i32
    %c0_i32_0 = arith.constant 0 : i32
    return %arg0, %c0_i32 : i32, i32
  }
}

</mosaic_0001>

<llo_original>
// kernel: sddtpc_lifnet_forward.1
$region0: #{sddtpc_lifnet_forward.1}
  #allocation0 [shape = 'u32[]', space=smem, size = 0x4, offset = 0x4, fixed_abs, tag = 'smem constant byte address 0x4 - core index']
  #allocation1 [shape = 'u32[144,128]{1,0:T(1,128)}', space=vmem, size = 0x12000, scoped, tag = 'internal scratch']
  %s0 = inlined_call_operand.vmem [shape: bf16[8,256], index: 0, kind: input, shape index: {}]
  %s1 = inlined_call_operand.vmem [shape: bf16[256,128], index: 1, kind: input, shape index: {}]
  %s2 = inlined_call_operand.vmem [shape: bf16[128,128], index: 2, kind: input, shape index: {}]
  %s3 = inlined_call_operand.vmem [shape: f32[8,128], index: 3, kind: output, shape index: {}]
  %s4 = sld [smem:[#allocation0]]
  $region22: #{sddtpc_lifnet_forward.1} parent=0
    _
  %s6 = ssub.s32 1, %s4
  %s7 = scalar_select 0, %s6, %s4
  // Predicated region
  $region2: #{sddtpc_lifnet_forward.1} parent=0 // pred_check
    _
  $region3: #{sddtpc_lifnet_forward.1} parent=0 // pred_check_branch
    %9 = sbr.rel (0) target = $region5
  $region4: #{sddtpc_lifnet_forward.1} parent=0 // pred_region
    _
  $region5: #{sddtpc_lifnet_forward.1} parent=0 // pred_fallthru
    _
  // Predicated region
  $region6: #{sddtpc_lifnet_forward.1} parent=0 // pred_check
    _
  $region7: #{sddtpc_lifnet_forward.1} parent=0 // pred_check_branch
    %11 = sbr.rel (0) target = $region9
  $region8: #{sddtpc_lifnet_forward.1} parent=0 // pred_region
    _
  $region9: #{sddtpc_lifnet_forward.1} parent=0 // pred_fallthru
    _
  // Predicated region
  $region10: #{sddtpc_lifnet_forward.1} parent=0 // pred_check
    _
  $region11: #{sddtpc_lifnet_forward.1} parent=0 // pred_check_branch
    %13 = sbr.rel (0) target = $region13
  $region12: #{sddtpc_lifnet_forward.1} parent=0 // pred_region
    _
  $region13: #{sddtpc_lifnet_forward.1} parent=0 // pred_fallthru
    _
  %v15 = vld [vmem:[%s0] sm:$0xff]
  %v16 = vld [vmem:[%s1] sm:$0xf]
  %v17 = vld [vmem:[%s1 + $0x4] sm:$0xf]
  %v18 = vld [vmem:[%s1 + $0x8] sm:$0xf]
  %v19 = vld [vmem:[%s1 + $0xc] sm:$0xf]
  %v20 = vld [vmem:[%s1 + $0x10] sm:$0xf]
  %v21 = vld [vmem:[%s1 + $0x14] sm:$0xf]
  %v22 = vld [vmem:[%s1 + $0x18] sm:$0xf]
  %v23 = vld [vmem:[%s1 + $0x1c] sm:$0xf]
  %v24 = vld [vmem:[%s1 + $0x20] sm:$0xf]
  %v25 = vld [vmem:[%s1 + $0x24] sm:$0xf]
  %v26 = vld [vmem:[%s1 + $0x28] sm:$0xf]
  %v27 = vld [vmem:[%s1 + $0x2c] sm:$0xf]
  %v28 = vld [vmem:[%s1 + $0x30] sm:$0xf]
  %v29 = vld [vmem:[%s1 + $0x34] sm:$0xf]
  %v30 = vld [vmem:[%s1 + $0x38] sm:$0xf]
  %v31 = vld [vmem:[%s1 + $0x3c] sm:$0xf]
  %v32 = vld [vmem:[%s1 + $0x40] sm:$0xf]
  %v33 = vld [vmem:[%s1 + $0x44] sm:$0xf]
  %v34 = vld [vmem:[%s1 + $0x48] sm:$0xf]
  %v35 = vld [vmem:[%s1 + $0x4c] sm:$0xf]
  %v36 = vld [vmem:[%s1 + $0x50] sm:$0xf]
  %v37 = vld [vmem:[%s1 + $0x54] sm:$0xf]
  %v38 = vld [vmem:[%s1 + $0x58] sm:$0xf]
  %v39 = vld [vmem:[%s1 + $0x5c] sm:$0xf]
  %v40 = vld [vmem:[%s1 + $0x60] sm:$0xf]
  %v41 = vld [vmem:[%s1 + $0x64] sm:$0xf]
  %v42 = vld [vmem:[%s1 + $0x68] sm:$0xf]
  %v43 = vld [vmem:[%s1 + $0x6c] sm:$0xf]
  %v44 = vld [vmem:[%s1 + $0x70] sm:$0xf]
  %v45 = vld [vmem:[%s1 + $0x74] sm:$0xf]
  %v46 = vld [vmem:[%s1 + $0x78] sm:$0xf]
  %v47 = vld [vmem:[%s1 + $0x7c] sm:$0xf]
  %v49 = vunpack.c.l.b16 %v15
  %v50 = vunpack.c.h.b16 %v15
  %v51 = vpack.c.b16 %v49, %v49
  %v52 = vpack.c.b16 %v50, %v50
  %v87 = vunpack.c.l.b16 %v16
  %v88 = vunpack.c.l.b16 %v17
  %v89 = vunpack.c.l.b16 %v18
  %v90 = vunpack.c.l.b16 %v19
  %v91 = vunpack.c.l.b16 %v20
  %v92 = vunpack.c.l.b16 %v21
  %v93 = vunpack.c.l.b16 %v22
  %v94 = vunpack.c.l.b16 %v23
  %v95 = vunpack.c.l.b16 %v24
  %v96 = vunpack.c.l.b16 %v25
  %v97 = vunpack.c.l.b16 %v26
  %v98 = vunpack.c.l.b16 %v27
  %v99 = vunpack.c.l.b16 %v28
  %v100 = vunpack.c.l.b16 %v29
  %v101 = vunpack.c.l.b16 %v30
  %v102 = vunpack.c.l.b16 %v31
  %v103 = vunpack.c.l.b16 %v32
  %v104 = vunpack.c.l.b16 %v33
  %v105 = vunpack.c.l.b16 %v34
  %v106 = vunpack.c.l.b16 %v35
  %v107 = vunpack.c.l.b16 %v36
  %v108 = vunpack.c.l.b16 %v37
  %v109 = vunpack.c.l.b16 %v38
  %v110 = vunpack.c.l.b16 %v39
  %v111 = vunpack.c.l.b16 %v40
  %v112 = vunpack.c.l.b16 %v41
  %v113 = vunpack.c.l.b16 %v42
  %v114 = vunpack.c.l.b16 %v43
  %v115 = vunpack.c.l.b16 %v44
  %v116 = vunpack.c.l.b16 %v45
  %v117 = vunpack.c.l.b16 %v46
  %v118 = vunpack.c.l.b16 %v47
  %v119 = vpack.c.b16 %v88, %v87
  %v120 = vpack.c.b16 %v90, %v89
  %v121 = vpack.c.b16 %v92, %v91
  %v122 = vpack.c.b16 %v94, %v93
  %v123 = vpack.c.b16 %v96, %v95
  %v124 = vpack.c.b16 %v98, %v97
  %v125 = vpack.c.b16 %v100, %v99
  %v126 = vpack.c.b16 %v102, %v101
  %v127 = vpack.c.b16 %v104, %v103
  %v128 = vpack.c.b16 %v106, %v105
  %v129 = vpack.c.b16 %v108, %v107
  %v130 = vpack.c.b16 %v110, %v109
  %v131 = vpack.c.b16 %v112, %v111
  %v132 = vpack.c.b16 %v114, %v113
  %v133 = vpack.c.b16 %v116, %v115
  %v134 = vpack.c.b16 %v118, %v117
  %151 = vmatprep.subr.bf16.mxu0 0
  %152 = vmatpush1.bf16.msra.mxu0 %v119
  %153 = vmatprep.subr.bf16.mxu0 0
  %154 = vmatpush1.bf16.msra.mxu0 %v120
  %155 = vmatprep.subr.bf16.mxu0 0
  %156 = vmatpush1.bf16.msra.mxu0 %v121
  %157 = vmatprep.subr.bf16.mxu0 0
  %158 = vmatpush1.bf16.msra.mxu0 %v122
  %159 = vmatprep.subr.bf16.mxu0 0
  %160 = vmatpush1.bf16.msra.mxu0 %v123
  %161 = vmatprep.subr.bf16.mxu0 0
  %162 = vmatpush1.bf16.msra.mxu0 %v124
  %163 = vmatprep.subr.bf16.mxu0 0
  %164 = vmatpush1.bf16.msra.mxu0 %v125
  %165 = vmatprep.subr.bf16.mxu0 0
  %166 = vmatpush1.bf16.msra.mxu0 %v126
  %167 = vmatprep.subr.bf16.mxu0 0
  %168 = vmatpush1.bf16.msra.mxu0 %v127
  %169 = vmatprep.subr.bf16.mxu0 0
  %170 = vmatpush1.bf16.msra.mxu0 %v128
  %171 = vmatprep.subr.bf16.mxu0 0
  %172 = vmatpush1.bf16.msra.mxu0 %v129
  %173 = vmatprep.subr.bf16.mxu0 0
  %174 = vmatpush1.bf16.msra.mxu0 %v130
  %175 = vmatprep.subr.bf16.mxu0 0
  %176 = vmatpush1.bf16.msra.mxu0 %v131
  %177 = vmatprep.subr.bf16.mxu0 0
  %178 = vmatpush1.bf16.msra.mxu0 %v132
  %179 = vmatprep.subr.bf16.mxu0 0
  %180 = vmatpush1.bf16.msra.mxu0 %v133
  %181 = vmatprep.subr.bf16.mxu0 0
  %182 = vmatpush1.bf16.msra.mxu0 %v134
  %183 = vmatprep.mubr.bf16.mxu0 %v52
  %184 = vmatmul.mubr.bf16.gmra.mrb[0].mxu0 %v51
  %v185 = vpop.f32.mrb[0].mxu0
  %v186 = vadd.f32 0.0, %v185
  %v187 = vpop.f32.mrb[0].mxu0
  %v188 = vpop.f32.mrb[0].mxu0
  %v189 = vpop.f32.mrb[0].mxu0
  %190 = vdwg.mxu0
  %v191 = vmul.f32 %v186, 0.5
  %v192 = vld [vmem:[%s2] sm:$0xf]
  %v193 = vld [vmem:[%s2 + $0x4] sm:$0xf]
  %v194 = vld [vmem:[%s2 + $0x8] sm:$0xf]
  %v195 = vld [vmem:[%s2 + $0xc] sm:$0xf]
  %v196 = vld [vmem:[%s2 + $0x10] sm:$0xf]
  %v197 = vld [vmem:[%s2 + $0x14] sm:$0xf]
  %v198 = vld [vmem:[%s2 + $0x18] sm:$0xf]
  %v199 = vld [vmem:[%s2 + $0x1c] sm:$0xf]
  %v200 = vld [vmem:[%s2 + $0x20] sm:$0xf]
  %v201 = vld [vmem:[%s2 + $0x24] sm:$0xf]
  %v202 = vld [vmem:[%s2 + $0x28] sm:$0xf]
  %v203 = vld [vmem:[%s2 + $0x2c] sm:$0xf]
  %v204 = vld [vmem:[%s2 + $0x30] sm:$0xf]
  %v205 = vld [vmem:[%s2 + $0x34] sm:$0xf]
  %v206 = vld [vmem:[%s2 + $0x38] sm:$0xf]
  %v207 = vld [vmem:[%s2 + $0x3c] sm:$0xf]
  %v208 = vadd.f32 %v191, 0.0
  %vm209 = vcmp.ge.f32.partialorder %v208, 2.0
  %v210 = vsel %vm209, 1, 0
  %v211 = vcvt.s32.f32 %v210
  %v212 = vpack.c.bf16 %v211, %v211
  %v213 = vsel %vm209, 0.0, %v208
  %v230 = vunpack.c.l.b16 %v192
  %v231 = vunpack.c.l.b16 %v193
  %v232 = vunpack.c.l.b16 %v194
  %v233 = vunpack.c.l.b16 %v195
  %v234 = vunpack.c.l.b16 %v196
  %v235 = vunpack.c.l.b16 %v197
  %v236 = vunpack.c.l.b16 %v198
  %v237 = vunpack.c.l.b16 %v199
  %v238 = vunpack.c.l.b16 %v200
  %v239 = vunpack.c.l.b16 %v201
  %v240 = vunpack.c.l.b16 %v202
  %v241 = vunpack.c.l.b16 %v203
  %v242 = vunpack.c.l.b16 %v204
  %v243 = vunpack.c.l.b16 %v205
  %v244 = vunpack.c.l.b16 %v206
  %v245 = vunpack.c.l.b16 %v207
  %v246 = vpack.c.b16 %v231, %v230
  %v247 = vpack.c.b16 %v233, %v232
  %v248 = vpack.c.b16 %v235, %v234
  %v249 = vpack.c.b16 %v237, %v236
  %v250 = vpack.c.b16 %v239, %v238
  %v251 = vpack.c.b16 %v241, %v240
  %v252 = vpack.c.b16 %v243, %v242
  %v253 = vpack.c.b16 %v245, %v244
  %262 = vmatprep.subr.bf16.mxu0 0
  %263 = vmatpush1.bf16.msra.mxu0 %v246
  %264 = vmatprep.subr.bf16.mxu0 0
  %265 = vmatpush1.bf16.msra.mxu0 %v247
  %266 = vmatprep.subr.bf16.mxu0 0
  %267 = vmatpush1.bf16.msra.mxu0 %v248
  %268 = vmatprep.subr.bf16.mxu0 0
  %269 = vmatpush1.bf16.msra.mxu0 %v249
  %270 = vmatprep.subr.bf16.mxu0 0
  %271 = vmatpush1.bf16.msra.mxu0 %v250
  %272 = vmatprep.subr.bf16.mxu0 0
  %273 = vmatpush1.bf16.msra.mxu0 %v251
  %274 = vmatprep.subr.bf16.mxu0 0
  %275 = vmatpush1.bf16.msra.mxu0 %v252
  %276 = vmatprep.subr.bf16.mxu0 0
  %277 = vmatpush1.bf16.msra.mxu0 %v253
  %278 = vmatprep.subr.bf16.mxu0 0
  %279 = vmatpush1.bf16.msra.mxu0 0
  %280 = vmatprep.subr.bf16.mxu0 0
  %281 = vmatpush1.bf16.msra.mxu0 0
  %282 = vmatprep.subr.bf16.mxu0 0
  %283 = vmatpush1.bf16.msra.mxu0 0
  %284 = vmatprep.subr.bf16.mxu0 0
  %285 = vmatpush1.bf16.msra.mxu0 0
  %286 = vmatprep.subr.bf16.mxu0 0
  %287 = vmatpush1.bf16.msra.mxu0 0
  %288 = vmatprep.subr.bf16.mxu0 0
  %289 = vmatpush1.bf16.msra.mxu0 0
  %290 = vmatprep.subr.bf16.mxu0 0
  %291 = vmatpush1.bf16.msra.mxu0 0
  %292 = vmatprep.subr.bf16.mxu0 0
  %293 = vmatpush1.bf16.msra.mxu0 0
  %294 = vmatprep.mubr.bf16.mxu0 0
  %295 = vmatmul.mubr.bf16.gmra.mrb[0].mxu0 %v212
  %v296 = vpop.f32.mrb[0].mxu0
  %v297 = vadd.f32 0.0, %v296
  %v298 = vpop.f32.mrb[0].mxu0
  %v299 = vpop.f32.mrb[0].mxu0
  %v300 = vpop.f32.mrb[0].mxu0
  %301 = vdwg.mxu0
  %v302 = vmul.f32 %v297, 0.5
  %v303 = vadd.f32 %v302, 0.0
  %vm304 = vcmp.ge.f32.partialorder %v303, 2.0
  %v305 = vsel %vm304, 1, 0
  %v306 = vcvt.s32.f32 %v305
  %v307 = vadd.f32 %v306, 0.0
  %v308 = vsel %vm304, 0.0, %v303
  %v309 = vmul.f32 %v213, 0.5
  %v310 = vadd.f32 %v309, %v191
  %vm311 = vcmp.ge.f32.partialorder %v310, 2.0
  %v312 = vsel %vm311, 1, 0
  %v313 = vcvt.s32.f32 %v312
  %v314 = vpack.c.bf16 %v313, %v313
  %v315 = vsel %vm311, 0.0, %v310
  %316 = vmatprep.subr.bf16.mxu0 0
  %317 = vmatpush1.bf16.msra.mxu0 %v246
  %318 = vmatprep.subr.bf16.mxu0 0
  %319 = vmatpush1.bf16.msra.mxu0 %v247
  %320 = vmatprep.subr.bf16.mxu0 0
  %321 = vmatpush1.bf16.msra.mxu0 %v248
  %322 = vmatprep.subr.bf16.mxu0 0
  %323 = vmatpush1.bf16.msra.mxu0 %v249
  %324 = vmatprep.subr.bf16.mxu0 0
  %325 = vmatpush1.bf16.msra.mxu0 %v250
  %326 = vmatprep.subr.bf16.mxu0 0
  %327 = vmatpush1.bf16.msra.mxu0 %v251
  %328 = vmatprep.subr.bf16.mxu0 0
  %329 = vmatpush1.bf16.msra.mxu0 %v252
  %330 = vmatprep.subr.bf16.mxu0 0
  %331 = vmatpush1.bf16.msra.mxu0 %v253
  %332 = vmatprep.subr.bf16.mxu0 0
  %333 = vmatpush1.bf16.msra.mxu0 0
  %334 = vmatprep.subr.bf16.mxu0 0
  %335 = vmatpush1.bf16.msra.mxu0 0
  %336 = vmatprep.subr.bf16.mxu0 0
  %337 = vmatpush1.bf16.msra.mxu0 0
  %338 = vmatprep.subr.bf16.mxu0 0
  %339 = vmatpush1.bf16.msra.mxu0 0
  %340 = vmatprep.subr.bf16.mxu0 0
  %341 = vmatpush1.bf16.msra.mxu0 0
  %342 = vmatprep.subr.bf16.mxu0 0
  %343 = vmatpush1.bf16.msra.mxu0 0
  %344 = vmatprep.subr.bf16.mxu0 0
  %345 = vmatpush1.bf16.msra.mxu0 0
  %346 = vmatprep.subr.bf16.mxu0 0
  %347 = vmatpush1.bf16.msra.mxu0 0
  %348 = vmatprep.mubr.bf16.mxu0 0
  %349 = vmatmul.mubr.bf16.gmra.mrb[0].mxu0 %v314
  %v350 = vpop.f32.mrb[0].mxu0
  %v351 = vadd.f32 0.0, %v350
  %v352 = vpop.f32.mrb[0].mxu0
  %v353 = vpop.f32.mrb[0].mxu0
  %v354 = vpop.f32.mrb[0].mxu0
  %355 = vdwg.mxu0
  %v356 = vmul.f32 %v308, 0.5
  %v357 = vmul.f32 %v351, 0.5
  %v358 = vadd.f32 %v356, %v357
  %vm359 = vcmp.ge.f32.partialorder %v358, 2.0
  %v360 = vsel %vm359, 1, 0
  %v361 = vcvt.s32.f32 %v360
  %v362 = vadd.f32 %v307, %v361
  %v363 = vsel %vm359, 0.0, %v358
  %v364 = vmul.f32 %v315, 0.5
  %v365 = vadd.f32 %v364, %v191
  %vm366 = vcmp.ge.f32.partialorder %v365, 2.0
  %v367 = vsel %vm366, 1, 0
  %v368 = vcvt.s32.f32 %v367
  %v369 = vpack.c.bf16 %v368, %v368
  %v370 = vsel %vm366, 0.0, %v365
  %371 = vmatprep.subr.bf16.mxu0 0
  %372 = vmatpush1.bf16.msra.mxu0 %v246
  %373 = vmatprep.subr.bf16.mxu0 0
  %374 = vmatpush1.bf16.msra.mxu0 %v247
  %375 = vmatprep.subr.bf16.mxu0 0
  %376 = vmatpush1.bf16.msra.mxu0 %v248
  %377 = vmatprep.subr.bf16.mxu0 0
  %378 = vmatpush1.bf16.msra.mxu0 %v249
  %379 = vmatprep.subr.bf16.mxu0 0
  %380 = vmatpush1.bf16.msra.mxu0 %v250
  %381 = vmatprep.subr.bf16.mxu0 0
  %382 = vmatpush1.bf16.msra.mxu0 %v251
  %383 = vmatprep.subr.bf16.mxu0 0
  %384 = vmatpush1.bf16.msra.mxu0 %v252
  %385 = vmatprep.subr.bf16.mxu0 0
  %386 = vmatpush1.bf16.msra.mxu0 %v253
  %387 = vmatprep.subr.bf16.mxu0 0
  %388 = vmatpush1.bf16.msra.mxu0 0
  %389 = vmatprep.subr.bf16.mxu0 0
  %390 = vmatpush1.bf16.msra.mxu0 0
  %391 = vmatprep.subr.bf16.mxu0 0
  %392 = vmatpush1.bf16.msra.mxu0 0
  %393 = vmatprep.subr.bf16.mxu0 0
  %394 = vmatpush1.bf16.msra.mxu0 0
  %395 = vmatprep.subr.bf16.mxu0 0
  %396 = vmatpush1.bf16.msra.mxu0 0
  %397 = vmatprep.subr.bf16.mxu0 0
  %398 = vmatpush1.bf16.msra.mxu0 0
  %399 = vmatprep.subr.bf16.mxu0 0
  %400 = vmatpush1.bf16.msra.mxu0 0
  %401 = vmatprep.subr.bf16.mxu0 0
  %402 = vmatpush1.bf16.msra.mxu0 0
  %403 = vmatprep.mubr.bf16.mxu0 0
  %404 = vmatmul.mubr.bf16.gmra.mrb[0].mxu0 %v369
  %v405 = vpop.f32.mrb[0].mxu0
  %v406 = vadd.f32 0.0, %v405
  %v407 = vpop.f32.mrb[0].mxu0
  %v408 = vpop.f32.mrb[0].mxu0
  %v409 = vpop.f32.mrb[0].mxu0
  %410 = vdwg.mxu0
  %v411 = vmul.f32 %v363, 0.5
  %v412 = vmul.f32 %v406, 0.5
  %v413 = vadd.f32 %v411, %v412
  %vm414 = vcmp.ge.f32.partialorder %v413, 2.0
  %v415 = vsel %vm414, 1, 0
  %v416 = vcvt.s32.f32 %v415
  %v417 = vadd.f32 %v362, %v416
  %v418 = vsel %vm414, 0.0, %v413
  %v419 = vmul.f32 %v370, 0.5
  %v420 = vadd.f32 %v419, %v191
  %vm421 = vcmp.ge.f32.partialorder %v420, 2.0
  %v422 = vsel %vm421, 1, 0
  %v423 = vcvt.s32.f32 %v422
  %v424 = vpack.c.bf16 %v423, %v423
  %425 = vmatprep.subr.bf16.mxu0 0
  %426 = vmatpush1.bf16.msra.mxu0 %v246
  %427 = vmatprep.subr.bf16.mxu0 0
  %428 = vmatpush1.bf16.msra.mxu0 %v247
  %429 = vmatprep.subr.bf16.mxu0 0
  %430 = vmatpush1.bf16.msra.mxu0 %v248
  %431 = vmatprep.subr.bf16.mxu0 0
  %432 = vmatpush1.bf16.msra.mxu0 %v249
  %433 = vmatprep.subr.bf16.mxu0 0
  %434 = vmatpush1.bf16.msra.mxu0 %v250
  %435 = vmatprep.subr.bf16.mxu0 0
  %436 = vmatpush1.bf16.msra.mxu0 %v251
  %437 = vmatprep.subr.bf16.mxu0 0
  %438 = vmatpush1.bf16.msra.mxu0 %v252
  %439 = vmatprep.subr.bf16.mxu0 0
  %440 = vmatpush1.bf16.msra.mxu0 %v253
  %441 = vmatprep.subr.bf16.mxu0 0
  %442 = vmatpush1.bf16.msra.mxu0 0
  %443 = vmatprep.subr.bf16.mxu0 0
  %444 = vmatpush1.bf16.msra.mxu0 0
  %445 = vmatprep.subr.bf16.mxu0 0
  %446 = vmatpush1.bf16.msra.mxu0 0
  %447 = vmatprep.subr.bf16.mxu0 0
  %448 = vmatpush1.bf16.msra.mxu0 0
  %449 = vmatprep.subr.bf16.mxu0 0
  %450 = vmatpush1.bf16.msra.mxu0 0
  %451 = vmatprep.subr.bf16.mxu0 0
  %452 = vmatpush1.bf16.msra.mxu0 0
  %453 = vmatprep.subr.bf16.mxu0 0
  %454 = vmatpush1.bf16.msra.mxu0 0
  %455 = vmatprep.subr.bf16.mxu0 0
  %456 = vmatpush1.bf16.msra.mxu0 0
  %457 = vmatprep.mubr.bf16.mxu0 0
  %458 = vmatmul.mubr.bf16.gmra.mrb[0].mxu0 %v424
  %v459 = vpop.f32.mrb[0].mxu0
  %v460 = vadd.f32 0.0, %v459
  %v461 = vpop.f32.mrb[0].mxu0
  %v462 = vpop.f32.mrb[0].mxu0
  %v463 = vpop.f32.mrb[0].mxu0
  %464 = vdwg.mxu0
  %v465 = vmul.f32 %v418, 0.5
  %v466 = vmul.f32 %v460, 0.5
  %v467 = vadd.f32 %v465, %v466
  %vm468 = vcmp.ge.f32.partialorder %v467, 2.0
  %v469 = vsel %vm468, 1, 0
  %v470 = vcvt.s32.f32 %v469
  %v471 = vadd.f32 %v417, %v470
  %v472 = vmul.f32 %v471, 0.25
  %473 = vst [vmem:[%s3] sm:$0xff] %v472
  // Predicated region
  $region14: #{sddtpc_lifnet_forward.1} parent=0 // pred_check
    _
  $region15: #{sddtpc_lifnet_forward.1} parent=0 // pred_check_branch
    %475 = sbr.rel (0) target = $region17
  $region16: #{sddtpc_lifnet_forward.1} parent=0 // pred_region
    _
  $region17: #{sddtpc_lifnet_forward.1} parent=0 // pred_fallthru
    _
  // Predicated region
  $region18: #{sddtpc_lifnet_forward.1} parent=0 // pred_check
    _
  $region19: #{sddtpc_lifnet_forward.1} parent=0 // pred_check_branch
    %477 = sbr.rel (0) target = $region21
  $region20: #{sddtpc_lifnet_forward.1} parent=0 // pred_region
    _
  $region21: #{sddtpc_lifnet_forward.1} parent=0 // pred_fallthru
    _

</llo_original>
